<compile_context>
chip_gen: v7x
topology: tpu7x:2x2x1
jax: 0.10.0
libtpu: 0.0.40
codegen_flags: <defaults>
</compile_context>

<pallas_src>
import jax
import jax.numpy as jnp
from jax.experimental import pallas as pl
from jax.experimental.pallas import tpu as pltpu

S_CELLS = 7
N_BOXES = 2
N_CLASSES = 20
LAMBDA_NOOBJ = 0.5
LAMBDA_COORD = 5.0
IOU_EPS = 1e-6  # Metric.intersection_over_union epsilon (canonical value)

LANES = 128
SUBLANES = 8
NUM_SHARDS = 2        # leading "parallel" grid axis (both TCs on v7x)
MAX_TILE_ROWS = 64    # 64 rows x 128 lanes = 8192 cells per pipeline step


def _round_up(x, m):
    return ((x + m - 1) // m) * m


def _cdiv(a, b):
    return (a + b - 1) // b


# --------------------------------------------------------------------------- #
# Kernel
# --------------------------------------------------------------------------- #
def yolo_loss_kernel(pred_ref, tgt_ref, out_ref):
    """pred_ref: (30, R, 128), tgt_ref: (25, R, 128), out_ref: (1, 8, 128)."""
    t = pl.program_id(1)

    @pl.when(t == 0)
    def _init():
        out_ref[...] = jnp.zeros_like(out_ref)

    p = pred_ref[...].astype(jnp.float32)   # (30, R, 128)
    tg = tgt_ref[...].astype(jnp.float32)   # (25, R, 128)

    exists = tg[20]                         # (R, 128) objectness (0/1)
    no_exists = 1.0 - exists

    # Target box + corners, hoisted once (shared by both IoU computations).
    tx, ty, tw, th = tg[21], tg[22], tg[23], tg[24]
    t_x1 = tx - 0.5 * tw
    t_y1 = ty - 0.5 * th
    t_x2 = tx + 0.5 * tw
    t_y2 = ty + 0.5 * th
    t_area = jnp.abs((t_x2 - t_x1) * (t_y2 - t_y1))

    def iou_with_target(bx, by, bw, bh):
        a_x1 = bx - 0.5 * bw
        a_y1 = by - 0.5 * bh
        a_x2 = bx + 0.5 * bw
        a_y2 = by + 0.5 * bh
        iw = jnp.maximum(jnp.minimum(a_x2, t_x2) - jnp.maximum(a_x1, t_x1), 0.0)
        ih = jnp.maximum(jnp.minimum(a_y2, t_y2) - jnp.maximum(a_y1, t_y1), 0.0)
        inter = iw * ih
        a_area = jnp.abs((a_x2 - a_x1) * (a_y2 - a_y1))
        return inter / (a_area + t_area - inter + IOU_EPS)

    b1x, b1y, b1w, b1h = p[21], p[22], p[23], p[24]
    b2x, b2y, b2w, b2h = p[26], p[27], p[28], p[29]

    iou1 = iou_with_target(b1x, b1y, b1w, b1h)
    iou2 = iou_with_target(b2x, b2y, b2w, b2h)

    best2 = iou2 > iou1                     # ties -> box 1 (torch.max first index)
    iou_max = jnp.maximum(iou1, iou2)

    # ---- coordinate loss -------------------------------------------------- #
    sel_x = jnp.where(best2, b2x, b1x)
    sel_y = jnp.where(best2, b2y, b1y)
    sel_w = jnp.where(best2, b2w, b1w)
    sel_h = jnp.where(best2, b2h, b1h)

    box_loss = (
        jnp.square(exists * (sel_x - tx))
        + jnp.square(exists * (sel_y - ty))
        + jnp.square(exists * sel_w - jnp.sqrt(exists * tw))
        + jnp.square(exists * sel_h - jnp.sqrt(exists * th))
    )

    # ---- object confidence loss ------------------------------------------- #
    pred_conf = jnp.where(best2, p[25], p[20])
    tgt_conf = exists * iou_max             # target[...,20] * iou_max
    object_loss = jnp.square(exists * (pred_conf - tgt_conf))

    # ---- no-object loss ---------------------------------------------------- #
    no_object_loss = (
        jnp.square(no_exists * (p[20] - exists))
        + jnp.square(no_exists * (p[25] - exists))
    )

    # ---- class loss --------------------------------------------------------- #
    cls_diff = exists[None, :, :] * (p[:20] - tg[:20])        # (20, R, 128)
    class_loss = jnp.sum(jnp.square(cls_diff), axis=0)        # (R, 128)

    # ---- combine + accumulate (vector accumulator, no scalar transfer) ------ #
    per_cell = (
        LAMBDA_COORD * box_loss
        + object_loss
        + LAMBDA_NOOBJ * no_object_loss
        + class_loss
    )                                                          # (R, 128)

    r = per_cell.shape[0]
    partial = jnp.sum(
        per_cell.reshape(r // SUBLANES, SUBLANES, LANES), axis=0, keepdims=True
    )                                                          # (1, 8, 128)
    out_ref[...] += partial


# --------------------------------------------------------------------------- #
# Wrapper
# --------------------------------------------------------------------------- #
def _to_channel_major(x, n_feat, cells, r_total):
    """(N,S,S,F) -> (F, r_total, 128), zero-padded cells, original dtype kept."""
    x = x.reshape(cells, n_feat)
    x = jnp.swapaxes(x, 0, 1)                              # (F, cells)
    x = jnp.pad(x, ((0, 0), (0, r_total * LANES - cells)))
    return x.reshape(n_feat, r_total, LANES)


def yolo_loss(predictions, target, S=S_CELLS, B=N_BOXES, C=N_CLASSES):
    n_feat_p = C + B * 5                                   # 30
    n_feat_t = C + 5                                       # 25
    predictions = predictions.reshape(-1, S, S, n_feat_p)
    n_batch = predictions.shape[0]
    assert target.shape == (n_batch, S, S, n_feat_t), target.shape

    cells = n_batch * S * S
    rows = _cdiv(cells, LANES)
    rows_per_shard = _cdiv(rows, NUM_SHARDS)
    # 16-row granularity keeps blocks legal for sub-32-bit (bf16) inputs too.
    tile_r = min(MAX_TILE_ROWS, _round_up(rows_per_shard, 16))
    tiles_per_shard = _cdiv(rows_per_shard, tile_r)
    r_total = NUM_SHARDS * tiles_per_shard * tile_r

    # Zero-padded cells contribute exactly 0 to every loss term.
    pred_cm = _to_channel_major(predictions, n_feat_p, cells, r_total)
    tgt_cm = _to_channel_major(target, n_feat_t, cells, r_total)

    partials = pl.pallas_call(
        yolo_loss_kernel,
        out_shape=jax.ShapeDtypeStruct((NUM_SHARDS, SUBLANES, LANES), jnp.float32),
        grid_spec=pltpu.PrefetchScalarGridSpec(
            num_scalar_prefetch=0,
            grid=(NUM_SHARDS, tiles_per_shard),
            in_specs=[
                pl.BlockSpec(
                    (n_feat_p, tile_r, LANES),
                    lambda s, t: (0, s * tiles_per_shard + t, 0),
                ),
                pl.BlockSpec(
                    (n_feat_t, tile_r, LANES),
                    lambda s, t: (0, s * tiles_per_shard + t, 0),
                ),
            ],
            out_specs=pl.BlockSpec((1, SUBLANES, LANES), lambda s, t: (s, 0, 0)),
        ),
        compiler_params=pltpu.CompilerParams(
            dimension_semantics=("parallel", "arbitrary"),
        ),
    )(pred_cm, tgt_cm)

    # Final reduction of the two (8,128) partial-sum slabs + batch mean
    # (multiply by the compile-time constant 1/N, no divide).
    return jnp.sum(partials) * jnp.float32(1.0 / n_batch)


# --------------------------------------------------------------------------- #
# Pure-JAX reference (original layout) for validation
# --------------------------------------------------------------------------- #
def _iou_midpoint_ref(box_a, box_b):
    a_x1 = box_a[..., 0:1] - box_a[..., 2:3] / 2.0
    a_y1 = box_a[..., 1:2] - box_a[..., 3:4] / 2.0
    a_x2 = box_a[..., 0:1] + box_a[..., 2:3] / 2.0
    a_y2 = box_a[..., 1:2] + box_a[..., 3:4] / 2.0
    b_x1 = box_b[..., 0:1] - box_b[..., 2:3] / 2.0
    b_y1 = box_b[..., 1:2] - box_b[..., 3:4] / 2.0
    b_x2 = box_b[..., 0:1] + box_b[..., 2:3] / 2.0
    b_y2 = box_b[..., 1:2] + box_b[..., 3:4] / 2.0
    ix1 = jnp.maximum(a_x1, b_x1)
    iy1 = jnp.maximum(a_y1, b_y1)
    ix2 = jnp.minimum(a_x2, b_x2)
    iy2 = jnp.minimum(a_y2, b_y2)
    inter = jnp.maximum(ix2 - ix1, 0.0) * jnp.maximum(iy2 - iy1, 0.0)
    area_a = jnp.abs((a_x2 - a_x1) * (a_y2 - a_y1))
    area_b = jnp.abs((b_x2 - b_x1) * (b_y2 - b_y1))
    return inter / (area_a + area_b - inter + IOU_EPS)


def _yolo_loss_reference(pred, tgt, n_batch):
    pred = pred.astype(jnp.float32)
    tgt = tgt.astype(jnp.float32)
    pred_box1 = pred[..., 21:25]
    pred_box2 = pred[..., 26:30]
    tgt_box = tgt[..., 21:25]
    iou_b1 = _iou_midpoint_ref(pred_box1, tgt_box)
    iou_b2 = _iou_midpoint_ref(pred_box2, tgt_box)
    best_box = (iou_b2 > iou_b1).astype(jnp.float32)
    iou_max = jnp.maximum(iou_b1, iou_b2)
    exists_box = tgt[..., 20:21]
    box_predictions = exists_box * (best_box * pred_box2 + (1.0 - best_box) * pred_box1)
    box_targets = exists_box * tgt_box
    box_loss = jnp.sum(jnp.square(box_predictions[..., 0:2] - box_targets[..., 0:2]), axis=-1)
    box_loss = box_loss + jnp.sum(
        jnp.square(box_predictions[..., 2:4] - jnp.sqrt(box_targets[..., 2:4])), axis=-1
    )
    pred_confidence = best_box * pred[..., 25:26] + (1.0 - best_box) * pred[..., 20:21]
    target_confidence = tgt[..., 20:21] * iou_max
    object_loss = jnp.sum(
        jnp.square(exists_box * pred_confidence - exists_box * target_confidence), axis=-1
    )
    no_exists = 1.0 - exists_box
    no_object_loss = jnp.sum(
        jnp.square(no_exists * pred[..., 20:21] - no_exists * tgt[..., 20:21]), axis=-1
    )
    no_object_loss = no_object_loss + jnp.sum(
        jnp.square(no_exists * pred[..., 25:26] - no_exists * tgt[..., 20:21]), axis=-1
    )
    class_loss = jnp.sum(
        jnp.square(exists_box * pred[..., :20] - exists_box * tgt[..., :20]), axis=-1
    )
    per_cell = (
        LAMBDA_COORD * box_loss + object_loss + LAMBDA_NOOBJ * no_object_loss + class_loss
    )
    return jnp.sum(per_cell) / jnp.float32(n_batch)


if __name__ == "__main__":
    key = jax.random.PRNGKey(0)
    k_pred, k_cls, k_pc, k_xy, k_wh = jax.random.split(key, 5)

    N = 2
    # predictions: (N, S, S, 30), values in (0, 1) ("normalized")
    predictions = jax.random.uniform(k_pred, (N, S_CELLS, S_CELLS, 30), dtype=jnp.float32)

    # target: (N, S, S, 25) = [20 class scores, pc, x, y, w, h]
    cls = jax.random.uniform(k_cls, (N, S_CELLS, S_CELLS, 20), dtype=jnp.float32)
    pc = (jax.random.uniform(k_pc, (N, S_CELLS, S_CELLS, 1)) > 0.7).astype(jnp.float32)
    xy = jax.random.uniform(k_xy, (N, S_CELLS, S_CELLS, 2), dtype=jnp.float32)
    wh = jax.random.uniform(
        k_wh, (N, S_CELLS, S_CELLS, 2), minval=0.05, maxval=1.0, dtype=jnp.float32
    )
    target = jnp.concatenate([cls, pc, xy, wh], axis=-1)

    loss = yolo_loss(predictions, target)
    loss = jax.block_until_ready(loss)

    ref = _yolo_loss_reference(predictions, target, N)
    assert jnp.isfinite(loss), "loss is not finite"
    assert jnp.allclose(loss, ref, rtol=1e-5, atol=1e-4), (loss, ref)

    print("KERNEL_OK")
</pallas_src>

<mosaic_0001>
module attributes {stable_mosaic.version = 11 : i64} {
  func.func @yolo_loss_kernel(%arg0: i32, %arg1: i32, %arg2: memref<30x16x128xf32, #tpu.memory_space<vmem>>, %arg3: memref<25x16x128xf32, #tpu.memory_space<vmem>>, %arg4: memref<1x8x128xf32, #tpu.memory_space<vmem>>) attributes {dimension_semantics = [#tpu.dimension_semantics<parallel>, #tpu.dimension_semantics<arbitrary>], iteration_bounds = array<i64: 2, 1>, scalar_prefetch = 0 : i64, scratch_operands = 0 : i64, tpu.core_type = #tpu.core_type<tc>, window_params = [{transform_indices = @transform_0, window_bounds = array<i64: 30, 16, 128>}, {transform_indices = @transform_1, window_bounds = array<i64: 25, 16, 128>}, {transform_indices = @transform_2, window_bounds = array<i64: 1, 8, 128>}]} {
    %c0_i32 = arith.constant 0 : i32
    %0 = arith.cmpi eq, %arg1, %c0_i32 : i32
    %1 = arith.extui %0 : i1 to i32
    %c0_i32_0 = arith.constant 0 : i32
    %2 = arith.cmpi ne, %1, %c0_i32_0 : i32
    scf.if %2 {
      %cst_34 = arith.constant 0.000000e+00 : f32
      %179 = vector.broadcast %cst_34 : f32 to vector<1x8x128xf32>
      %c0_35 = arith.constant 0 : index
      %c0_36 = arith.constant 0 : index
      %c0_37 = arith.constant 0 : index
      %180 = vector.load %arg4[%c0_35, %c0_36, %c0_37] : memref<1x8x128xf32, #tpu.memory_space<vmem>>, vector<1x8x128xf32>
      tpu.vector_store %arg4[%c0_35, %c0_36, %c0_37], %179 {strides = array<i32>} : memref<1x8x128xf32, #tpu.memory_space<vmem>>, vector<1x8x128xf32>,
    } else {
    }
    %c0 = arith.constant 0 : index
    %c0_1 = arith.constant 0 : index
    %c0_2 = arith.constant 0 : index
    %3 = vector.load %arg2[%c0, %c0_1, %c0_2] : memref<30x16x128xf32, #tpu.memory_space<vmem>>, vector<30x16x128xf32>
    %c0_3 = arith.constant 0 : index
    %c0_4 = arith.constant 0 : index
    %c0_5 = arith.constant 0 : index
    %4 = vector.load %arg3[%c0_3, %c0_4, %c0_5] : memref<25x16x128xf32, #tpu.memory_space<vmem>>, vector<25x16x128xf32>
    %5 = vector.extract_strided_slice %4 {offsets = [20, 0, 0], sizes = [1, 16, 128], strides = [1, 1, 1]} : vector<25x16x128xf32> to vector<1x16x128xf32>
    %6 = vector.shape_cast %5 : vector<1x16x128xf32> to vector<16x128xf32>
    %cst = arith.constant 1.000000e+00 : f32
    %7 = vector.broadcast %cst : f32 to vector<16x128xf32>
    %8 = arith.subf %7, %6 : vector<16x128xf32>
    %9 = vector.extract_strided_slice %4 {offsets = [21, 0, 0], sizes = [1, 16, 128], strides = [1, 1, 1]} : vector<25x16x128xf32> to vector<1x16x128xf32>
    %10 = vector.shape_cast %9 : vector<1x16x128xf32> to vector<16x128xf32>
    %11 = vector.extract_strided_slice %4 {offsets = [22, 0, 0], sizes = [1, 16, 128], strides = [1, 1, 1]} : vector<25x16x128xf32> to vector<1x16x128xf32>
    %12 = vector.shape_cast %11 : vector<1x16x128xf32> to vector<16x128xf32>
    %13 = vector.extract_strided_slice %4 {offsets = [23, 0, 0], sizes = [1, 16, 128], strides = [1, 1, 1]} : vector<25x16x128xf32> to vector<1x16x128xf32>
    %14 = vector.shape_cast %13 : vector<1x16x128xf32> to vector<16x128xf32>
    %15 = vector.extract_strided_slice %4 {offsets = [24, 0, 0], sizes = [1, 16, 128], strides = [1, 1, 1]} : vector<25x16x128xf32> to vector<1x16x128xf32>
    %16 = vector.shape_cast %15 : vector<1x16x128xf32> to vector<16x128xf32>
    %cst_6 = arith.constant 5.000000e-01 : f32
    %17 = vector.broadcast %cst_6 : f32 to vector<16x128xf32>
    %18 = arith.mulf %17, %14 : vector<16x128xf32>
    %19 = arith.subf %10, %18 : vector<16x128xf32>
    %cst_7 = arith.constant 5.000000e-01 : f32
    %20 = vector.broadcast %cst_7 : f32 to vector<16x128xf32>
    %21 = arith.mulf %20, %16 : vector<16x128xf32>
    %22 = arith.subf %12, %21 : vector<16x128xf32>
    %cst_8 = arith.constant 5.000000e-01 : f32
    %23 = vector.broadcast %cst_8 : f32 to vector<16x128xf32>
    %24 = arith.mulf %23, %14 : vector<16x128xf32>
    %25 = arith.addf %10, %24 : vector<16x128xf32>
    %cst_9 = arith.constant 5.000000e-01 : f32
    %26 = vector.broadcast %cst_9 : f32 to vector<16x128xf32>
    %27 = arith.mulf %26, %16 : vector<16x128xf32>
    %28 = arith.addf %12, %27 : vector<16x128xf32>
    %29 = arith.subf %25, %19 : vector<16x128xf32>
    %30 = arith.subf %28, %22 : vector<16x128xf32>
    %31 = arith.mulf %29, %30 : vector<16x128xf32>
    %32 = math.absf %31 : vector<16x128xf32>
    %33 = vector.extract_strided_slice %3 {offsets = [21, 0, 0], sizes = [1, 16, 128], strides = [1, 1, 1]} : vector<30x16x128xf32> to vector<1x16x128xf32>
    %34 = vector.shape_cast %33 : vector<1x16x128xf32> to vector<16x128xf32>
    %35 = vector.extract_strided_slice %3 {offsets = [22, 0, 0], sizes = [1, 16, 128], strides = [1, 1, 1]} : vector<30x16x128xf32> to vector<1x16x128xf32>
    %36 = vector.shape_cast %35 : vector<1x16x128xf32> to vector<16x128xf32>
    %37 = vector.extract_strided_slice %3 {offsets = [23, 0, 0], sizes = [1, 16, 128], strides = [1, 1, 1]} : vector<30x16x128xf32> to vector<1x16x128xf32>
    %38 = vector.shape_cast %37 : vector<1x16x128xf32> to vector<16x128xf32>
    %39 = vector.extract_strided_slice %3 {offsets = [24, 0, 0], sizes = [1, 16, 128], strides = [1, 1, 1]} : vector<30x16x128xf32> to vector<1x16x128xf32>
    %40 = vector.shape_cast %39 : vector<1x16x128xf32> to vector<16x128xf32>
    %41 = vector.extract_strided_slice %3 {offsets = [26, 0, 0], sizes = [1, 16, 128], strides = [1, 1, 1]} : vector<30x16x128xf32> to vector<1x16x128xf32>
    %42 = vector.shape_cast %41 : vector<1x16x128xf32> to vector<16x128xf32>
    %43 = vector.extract_strided_slice %3 {offsets = [27, 0, 0], sizes = [1, 16, 128], strides = [1, 1, 1]} : vector<30x16x128xf32> to vector<1x16x128xf32>
    %44 = vector.shape_cast %43 : vector<1x16x128xf32> to vector<16x128xf32>
    %45 = vector.extract_strided_slice %3 {offsets = [28, 0, 0], sizes = [1, 16, 128], strides = [1, 1, 1]} : vector<30x16x128xf32> to vector<1x16x128xf32>
    %46 = vector.shape_cast %45 : vector<1x16x128xf32> to vector<16x128xf32>
    %47 = vector.extract_strided_slice %3 {offsets = [29, 0, 0], sizes = [1, 16, 128], strides = [1, 1, 1]} : vector<30x16x128xf32> to vector<1x16x128xf32>
    %48 = vector.shape_cast %47 : vector<1x16x128xf32> to vector<16x128xf32>
    %cst_10 = arith.constant 5.000000e-01 : f32
    %49 = vector.broadcast %cst_10 : f32 to vector<16x128xf32>
    %50 = arith.mulf %49, %38 : vector<16x128xf32>
    %51 = arith.subf %34, %50 : vector<16x128xf32>
    %cst_11 = arith.constant 5.000000e-01 : f32
    %52 = vector.broadcast %cst_11 : f32 to vector<16x128xf32>
    %53 = arith.mulf %52, %40 : vector<16x128xf32>
    %54 = arith.subf %36, %53 : vector<16x128xf32>
    %cst_12 = arith.constant 5.000000e-01 : f32
    %55 = vector.broadcast %cst_12 : f32 to vector<16x128xf32>
    %56 = arith.mulf %55, %38 : vector<16x128xf32>
    %57 = arith.addf %34, %56 : vector<16x128xf32>
    %cst_13 = arith.constant 5.000000e-01 : f32
    %58 = vector.broadcast %cst_13 : f32 to vector<16x128xf32>
    %59 = arith.mulf %58, %40 : vector<16x128xf32>
    %60 = arith.addf %36, %59 : vector<16x128xf32>
    %61 = arith.minimumf %57, %25 : vector<16x128xf32>
    %62 = arith.maximumf %51, %19 : vector<16x128xf32>
    %63 = arith.subf %61, %62 : vector<16x128xf32>
    %cst_14 = arith.constant 0.000000e+00 : f32
    %64 = vector.broadcast %cst_14 : f32 to vector<16x128xf32>
    %65 = arith.maximumf %63, %64 : vector<16x128xf32>
    %66 = arith.minimumf %60, %28 : vector<16x128xf32>
    %67 = arith.maximumf %54, %22 : vector<16x128xf32>
    %68 = arith.subf %66, %67 : vector<16x128xf32>
    %cst_15 = arith.constant 0.000000e+00 : f32
    %69 = vector.broadcast %cst_15 : f32 to vector<16x128xf32>
    %70 = arith.maximumf %68, %69 : vector<16x128xf32>
    %71 = arith.mulf %65, %70 : vector<16x128xf32>
    %72 = arith.subf %57, %51 : vector<16x128xf32>
    %73 = arith.subf %60, %54 : vector<16x128xf32>
    %74 = arith.mulf %72, %73 : vector<16x128xf32>
    %75 = math.absf %74 : vector<16x128xf32>
    %76 = arith.addf %75, %32 : vector<16x128xf32>
    %77 = arith.subf %76, %71 : vector<16x128xf32>
    %cst_16 = arith.constant 9.99999997E-7 : f32
    %78 = vector.broadcast %cst_16 : f32 to vector<16x128xf32>
    %79 = arith.addf %77, %78 : vector<16x128xf32>
    %80 = arith.divf %71, %79 : vector<16x128xf32>
    %cst_17 = arith.constant 5.000000e-01 : f32
    %81 = vector.broadcast %cst_17 : f32 to vector<16x128xf32>
    %82 = arith.mulf %81, %46 : vector<16x128xf32>
    %83 = arith.subf %42, %82 : vector<16x128xf32>
    %cst_18 = arith.constant 5.000000e-01 : f32
    %84 = vector.broadcast %cst_18 : f32 to vector<16x128xf32>
    %85 = arith.mulf %84, %48 : vector<16x128xf32>
    %86 = arith.subf %44, %85 : vector<16x128xf32>
    %cst_19 = arith.constant 5.000000e-01 : f32
    %87 = vector.broadcast %cst_19 : f32 to vector<16x128xf32>
    %88 = arith.mulf %87, %46 : vector<16x128xf32>
    %89 = arith.addf %42, %88 : vector<16x128xf32>
    %cst_20 = arith.constant 5.000000e-01 : f32
    %90 = vector.broadcast %cst_20 : f32 to vector<16x128xf32>
    %91 = arith.mulf %90, %48 : vector<16x128xf32>
    %92 = arith.addf %44, %91 : vector<16x128xf32>
    %93 = arith.minimumf %89, %25 : vector<16x128xf32>
    %94 = arith.maximumf %83, %19 : vector<16x128xf32>
    %95 = arith.subf %93, %94 : vector<16x128xf32>
    %cst_21 = arith.constant 0.000000e+00 : f32
    %96 = vector.broadcast %cst_21 : f32 to vector<16x128xf32>
    %97 = arith.maximumf %95, %96 : vector<16x128xf32>
    %98 = arith.minimumf %92, %28 : vector<16x128xf32>
    %99 = arith.maximumf %86, %22 : vector<16x128xf32>
    %100 = arith.subf %98, %99 : vector<16x128xf32>
    %cst_22 = arith.constant 0.000000e+00 : f32
    %101 = vector.broadcast %cst_22 : f32 to vector<16x128xf32>
    %102 = arith.maximumf %100, %101 : vector<16x128xf32>
    %103 = arith.mulf %97, %102 : vector<16x128xf32>
    %104 = arith.subf %89, %83 : vector<16x128xf32>
    %105 = arith.subf %92, %86 : vector<16x128xf32>
    %106 = arith.mulf %104, %105 : vector<16x128xf32>
    %107 = math.absf %106 : vector<16x128xf32>
    %108 = arith.addf %107, %32 : vector<16x128xf32>
    %109 = arith.subf %108, %103 : vector<16x128xf32>
    %cst_23 = arith.constant 9.99999997E-7 : f32
    %110 = vector.broadcast %cst_23 : f32 to vector<16x128xf32>
    %111 = arith.addf %109, %110 : vector<16x128xf32>
    %112 = arith.divf %103, %111 : vector<16x128xf32>
    %113 = arith.cmpf ogt, %112, %80 : vector<16x128xf32>
    %114 = arith.maximumf %80, %112 : vector<16x128xf32>
    %115 = arith.select %113, %42, %34 : vector<16x128xi1>, vector<16x128xf32>
    %116 = arith.select %113, %44, %36 : vector<16x128xi1>, vector<16x128xf32>
    %117 = arith.select %113, %46, %38 : vector<16x128xi1>, vector<16x128xf32>
    %118 = arith.select %113, %48, %40 : vector<16x128xi1>, vector<16x128xf32>
    %119 = arith.subf %115, %10 : vector<16x128xf32>
    %120 = arith.mulf %6, %119 : vector<16x128xf32>
    %121 = arith.mulf %120, %120 : vector<16x128xf32>
    %122 = arith.subf %116, %12 : vector<16x128xf32>
    %123 = arith.mulf %6, %122 : vector<16x128xf32>
    %124 = arith.mulf %123, %123 : vector<16x128xf32>
    %125 = arith.addf %121, %124 : vector<16x128xf32>
    %126 = arith.mulf %6, %117 : vector<16x128xf32>
    %127 = arith.mulf %6, %14 : vector<16x128xf32>
    %128 = math.sqrt %127 : vector<16x128xf32>
    %129 = arith.subf %126, %128 : vector<16x128xf32>
    %130 = arith.mulf %129, %129 : vector<16x128xf32>
    %131 = arith.addf %125, %130 : vector<16x128xf32>
    %132 = arith.mulf %6, %118 : vector<16x128xf32>
    %133 = arith.mulf %6, %16 : vector<16x128xf32>
    %134 = math.sqrt %133 : vector<16x128xf32>
    %135 = arith.subf %132, %134 : vector<16x128xf32>
    %136 = arith.mulf %135, %135 : vector<16x128xf32>
    %137 = arith.addf %131, %136 : vector<16x128xf32>
    %138 = vector.extract_strided_slice %3 {offsets = [25, 0, 0], sizes = [1, 16, 128], strides = [1, 1, 1]} : vector<30x16x128xf32> to vector<1x16x128xf32>
    %139 = vector.shape_cast %138 : vector<1x16x128xf32> to vector<16x128xf32>
    %140 = vector.extract_strided_slice %3 {offsets = [20, 0, 0], sizes = [1, 16, 128], strides = [1, 1, 1]} : vector<30x16x128xf32> to vector<1x16x128xf32>
    %141 = vector.shape_cast %140 : vector<1x16x128xf32> to vector<16x128xf32>
    %142 = arith.select %113, %139, %141 : vector<16x128xi1>, vector<16x128xf32>
    %143 = arith.mulf %6, %114 : vector<16x128xf32>
    %144 = arith.subf %142, %143 : vector<16x128xf32>
    %145 = arith.mulf %6, %144 : vector<16x128xf32>
    %146 = arith.mulf %145, %145 : vector<16x128xf32>
    %147 = vector.extract_strided_slice %3 {offsets = [20, 0, 0], sizes = [1, 16, 128], strides = [1, 1, 1]} : vector<30x16x128xf32> to vector<1x16x128xf32>
    %148 = vector.shape_cast %147 : vector<1x16x128xf32> to vector<16x128xf32>
    %149 = arith.subf %148, %6 : vector<16x128xf32>
    %150 = arith.mulf %8, %149 : vector<16x128xf32>
    %151 = arith.mulf %150, %150 : vector<16x128xf32>
    %152 = vector.extract_strided_slice %3 {offsets = [25, 0, 0], sizes = [1, 16, 128], strides = [1, 1, 1]} : vector<30x16x128xf32> to vector<1x16x128xf32>
    %153 = vector.shape_cast %152 : vector<1x16x128xf32> to vector<16x128xf32>
    %154 = arith.subf %153, %6 : vector<16x128xf32>
    %155 = arith.mulf %8, %154 : vector<16x128xf32>
    %156 = arith.mulf %155, %155 : vector<16x128xf32>
    %157 = arith.addf %151, %156 : vector<16x128xf32>
    %158 = vector.shape_cast %6 : vector<16x128xf32> to vector<1x16x128xf32>
    %159 = vector.extract_strided_slice %3 {offsets = [0, 0, 0], sizes = [20, 16, 128], strides = [1, 1, 1]} : vector<30x16x128xf32> to vector<20x16x128xf32>
    %160 = vector.extract_strided_slice %4 {offsets = [0, 0, 0], sizes = [20, 16, 128], strides = [1, 1, 1]} : vector<25x16x128xf32> to vector<20x16x128xf32>
    %161 = arith.subf %159, %160 : vector<20x16x128xf32>
    %162 = vector.broadcast %158 : vector<1x16x128xf32> to vector<20x16x128xf32>
    %163 = arith.mulf %162, %161 : vector<20x16x128xf32>
    %164 = arith.mulf %163, %163 : vector<20x16x128xf32>
    %cst_24 = arith.constant dense<0.000000e+00> : vector<16x128xf32>
    %165 = vector.multi_reduction <add>, %164, %cst_24 [0] : vector<20x16x128xf32> to vector<16x128xf32>
    %cst_25 = arith.constant 5.000000e+00 : f32
    %166 = vector.broadcast %cst_25 : f32 to vector<16x128xf32>
    %167 = arith.mulf %166, %137 : vector<16x128xf32>
    %168 = arith.addf %167, %146 : vector<16x128xf32>
    %cst_26 = arith.constant 5.000000e-01 : f32
    %169 = vector.broadcast %cst_26 : f32 to vector<16x128xf32>
    %170 = arith.mulf %169, %157 : vector<16x128xf32>
    %171 = arith.addf %168, %170 : vector<16x128xf32>
    %172 = arith.addf %171, %165 : vector<16x128xf32>
    %173 = vector.shape_cast %172 : vector<16x128xf32> to vector<2x8x128xf32>
    %cst_27 = arith.constant dense<0.000000e+00> : vector<8x128xf32>
    %174 = vector.multi_reduction <add>, %173, %cst_27 [0] : vector<2x8x128xf32> to vector<8x128xf32>
    %175 = vector.shape_cast %174 : vector<8x128xf32> to vector<1x8x128xf32>
    %c0_28 = arith.constant 0 : index
    %c0_29 = arith.constant 0 : index
    %c0_30 = arith.constant 0 : index
    %176 = vector.load %arg4[%c0_28, %c0_29, %c0_30] : memref<1x8x128xf32, #tpu.memory_space<vmem>>, vector<1x8x128xf32>
    %177 = arith.addf %176, %175 : vector<1x8x128xf32>
    %c0_31 = arith.constant 0 : index
    %c0_32 = arith.constant 0 : index
    %c0_33 = arith.constant 0 : index
    %178 = vector.load %arg4[%c0_31, %c0_32, %c0_33] : memref<1x8x128xf32, #tpu.memory_space<vmem>>, vector<1x8x128xf32>
    tpu.vector_store %arg4[%c0_31, %c0_32, %c0_33], %177 {strides = array<i32>} : memref<1x8x128xf32, #tpu.memory_space<vmem>>, vector<1x8x128xf32>,
    return
  }
  func.func @transform_0(%arg0: i32, %arg1: i32) -> (i32, i32, i32) {
    %c1_i32 = arith.constant 1 : i32
    %0 = arith.muli %arg0, %c1_i32 : i32
    %1 = arith.addi %0, %arg1 : i32
    %c0_i32 = arith.constant 0 : i32
    %c0_i32_0 = arith.constant 0 : i32
    %c0_i32_1 = arith.constant 0 : i32
    return %c0_i32, %1, %c0_i32_0 : i32, i32, i32
  }
  func.func @transform_1(%arg0: i32, %arg1: i32) -> (i32, i32, i32) {
    %c1_i32 = arith.constant 1 : i32
    %0 = arith.muli %arg0, %c1_i32 : i32
    %1 = arith.addi %0, %arg1 : i32
    %c0_i32 = arith.constant 0 : i32
    %c0_i32_0 = arith.constant 0 : i32
    %c0_i32_1 = arith.constant 0 : i32
    return %c0_i32, %1, %c0_i32_0 : i32, i32, i32
  }
  func.func @transform_2(%arg0: i32, %arg1: i32) -> (i32, i32, i32) {
    %c0_i32 = arith.constant 0 : i32
    %c0_i32_0 = arith.constant 0 : i32
    %c0_i32_1 = arith.constant 0 : i32
    return %arg0, %c0_i32, %c0_i32_0 : i32, i32, i32
  }
}

</mosaic_0001>

<llo_original>
// kernel: tpu_custom_call.1
$region0: #{tpu_custom_call.1}
  #allocation0 [shape = 'u32[]', space=smem, size = 0x4, offset = 0x4, fixed_abs, tag = 'smem constant byte address 0x4 - core index']
  #allocation1 [shape = 'u32[144,128]{1,0:T(1,128)}', space=vmem, size = 0x12000, scoped, tag = 'internal scratch']
  #allocation8 [shape = 's32[]', space=sflag, size = 0x4, offset = 0, fixed_abs, tag = 'sflag constant byte address 0x0 - dummy sync flag']
  #allocation10 [shape = 's32[]', space=sflag, size = 0x4, offset = 0, fixed_abs, tag = 'sflag constant byte address 0x0 - dummy sync flag']
  %s0 = inlined_call_operand.hbm [shape: f32[30,32,128], index: 0, kind: input, shape index: {}]
  %s1 = inlined_call_operand.hbm [shape: f32[25,32,128], index: 1, kind: input, shape index: {}]
  %s2 = inlined_call_operand.hbm [shape: f32[2,8,128], index: 2, kind: output, shape index: {}]
  %s3 = sld [smem:[#allocation0]]
  $region53: #{tpu_custom_call.1} parent=0
    _
  %s5 = ssub.s32 1, %s3
  %s6 = scalar_select 0, %s5, %s3
  $region1: #{tpu_custom_call.1} parent=0
    #allocation2 [shape = 'u8[491520]{0}', space=vmem, size = 0x78000, scoped, tag = 'input window, operand 0']
    #allocation3 [shape = 's32[2]{0}', space=sflag, size = 0x8, scoped, tag = 'scoped memory for tpu_custom_call.1']
    #allocation4 [shape = 's32[2]{0}', space=sflag, size = 0x8, scoped, tag = 'scoped memory for tpu_custom_call.1']
    #allocation5 [shape = 'u8[409600]{0}', space=vmem, size = 0x64000, scoped, tag = 'input window, operand 1']
    #allocation6 [shape = 's32[2]{0}', space=sflag, size = 0x8, scoped, tag = 'scoped memory for tpu_custom_call.1']
    #allocation7 [shape = 'u8[8192]{0}', space=vmem, size = 0x2000, scoped, tag = 'output window, operand 0']
    %7 = vsyncpa [#allocation3], 0
    %s8 = scalar_lea.sflag [#allocation3], 1
    %9 = vsyncpa %s8, 0
    %10 = vsyncpa [#allocation6], 0
    %s11 = scalar_lea.sflag [#allocation6], 1
    %12 = vsyncpa %s11, 0
    %13 = vsyncpa [#allocation4], 0
    %s14 = scalar_lea.sflag [#allocation4], 1
    %15 = vsyncpa %s14, 0
    loop: start=0, step=1, limit=4
    $region2: #{tpu_custom_call.1} parent=1 // loop_pre_header
      _
    $region3: #{tpu_custom_call.1} parent=1 // loop_header
      %s17 = sphi 0, %s21
      %p18 = scmp.ge.s32.totalorder %s17, 4
      %s24 = sphi 0, %s36
      %s25 = sphi 0, %s32
      %s26 = sphi 0, %s24
      %s27 = sphi 0, %s25
      %s28 = sphi 0, %s26
      %s29 = sphi 0, %s27
      %s41 = sphi 0, %s43
      %s44 = sphi 0, %s41
      %s45 = sphi 0, %s44
      %s61 = sphi 0, %s45
      %s69 = sphi 0, %s71
      %s72 = sphi 0, %s69
      %s73 = sphi 0, %s72
      %s89 = sphi 0, %s73
      %s95 = sphi 0, %s97
      %s98 = sphi 0, %s95
      %s99 = sphi 0, %s98
      %s115 = sphi 0, %s99
    $region4: #{tpu_custom_call.1} parent=1 // loop_header_branch
      %20 = sbr.rel (%p18) target = $region8
    $region5: #{tpu_custom_call.1} parent=1 // loop_body
      %s22 = ssub.s32 %s17, 1
      %s23 = ssub.s32 %s17, 2
      %s30 = sadd.s32 1, %s25
      %p31 = scmp.ge.s32.totalorder %s30, 1
      %s32 = scalar_select %p31, 0, %s30
      %s33 = sadd.s32 1, %s24
      %s34 = scalar_select %p31, %s33, %s24
      %p35 = scmp.ge.s32.totalorder %s34, 2
      %s36 = scalar_select %p35, 0, %s34
      %s37 = sadd.s32 %s24, %s25
      %s38 = sadd.s32 %s36, %s32
      %s39 = ssub.s32 %s37, %s38
      %p40 = scmp.eq.s32.totalorder %s39, 0
      %s42 = sadd.s32 %s41, 1
      %s43 = scalar_select %p40, %s41, %s42
      %p46 = pneg %p40
      %p47 = scmp.eq.s32.totalorder %s17, 1
      %p48 = por %p46, %p47
      %p49 = scmp.ne.s32.totalorder %s41, %s44
      %p50 = scmp.eq.s32.totalorder %s17, 0
      %p51 = por %p49, %p50
      %p52 = scmp.ne.s32.totalorder %s41, %s44
      %p53 = scmp.eq.s32.totalorder %s22, 1
      %p54 = por %p52, %p53
      %p55 = scmp.ne.s32.totalorder %s44, %s45
      %p56 = scmp.eq.s32.totalorder %s22, 0
      %p57 = por %p55, %p56
      %p58 = scmp.ne.s32.totalorder %s44, %s45
      %p59 = scmp.eq.s32.totalorder %s23, 1
      %p60 = por %p58, %p59
      %p62 = scmp.ne.s32.totalorder %s45, %s61
      %p63 = scmp.eq.s32.totalorder %s23, 0
      %p64 = por %p62, %p63
      %s65 = sadd.s32 %s24, %s25
      %s66 = sadd.s32 %s36, %s32
      %s67 = ssub.s32 %s65, %s66
      %p68 = scmp.eq.s32.totalorder %s67, 0
      %s70 = sadd.s32 %s69, 1
      %s71 = scalar_select %p68, %s69, %s70
      %p74 = pneg %p68
      %p75 = scmp.eq.s32.totalorder %s17, 1
      %p76 = por %p74, %p75
      %p77 = scmp.ne.s32.totalorder %s69, %s72
      %p78 = scmp.eq.s32.totalorder %s17, 0
      %p79 = por %p77, %p78
      %p80 = scmp.ne.s32.totalorder %s69, %s72
      %p81 = scmp.eq.s32.totalorder %s22, 1
      %p82 = por %p80, %p81
      %p83 = scmp.ne.s32.totalorder %s72, %s73
      %p84 = scmp.eq.s32.totalorder %s22, 0
      %p85 = por %p83, %p84
      %p86 = scmp.ne.s32.totalorder %s72, %s73
      %p87 = scmp.eq.s32.totalorder %s23, 1
      %p88 = por %p86, %p87
      %p90 = scmp.ne.s32.totalorder %s73, %s89
      %p91 = scmp.eq.s32.totalorder %s23, 0
      %p92 = por %p90, %p91
      %s93 = ssub.s32 %s24, %s36
      %p94 = scmp.eq.s32.totalorder %s93, 0
      %s96 = sadd.s32 %s95, 1
      %s97 = scalar_select %p94, %s95, %s96
      %p100 = pneg %p94
      %p101 = scmp.eq.s32.totalorder %s17, 1
      %p102 = por %p100, %p101
      %p103 = scmp.ne.s32.totalorder %s95, %s98
      %p104 = scmp.eq.s32.totalorder %s17, 0
      %p105 = por %p103, %p104
      %p106 = scmp.ne.s32.totalorder %s95, %s98
      %p107 = scmp.eq.s32.totalorder %s22, 1
      %p108 = por %p106, %p107
      %p109 = scmp.ne.s32.totalorder %s98, %s99
      %p110 = scmp.eq.s32.totalorder %s22, 0
      %p111 = por %p109, %p110
      %p112 = scmp.ne.s32.totalorder %s98, %s99
      %p113 = scmp.eq.s32.totalorder %s23, 1
      %p114 = por %p112, %p113
      %p116 = scmp.ne.s32.totalorder %s99, %s115
      %p117 = scmp.eq.s32.totalorder %s23, 0
      %p118 = por %p116, %p117
      %p119 = scmp.le.s32.totalorder 1, %s17
      %p120 = scmp.lt.s32.totalorder %s17, 3
      %p121 = pnand %p119, %p120
      %p122 = pneg %p121
      // Predicated region
      $region9: #{tpu_custom_call.1} parent=5 // pred_check
        _
      $region10: #{tpu_custom_call.1} parent=5 // pred_check_branch
        %124 = sbr.rel (%p121) target = $region12
      $region11: #{tpu_custom_call.1} parent=5 // pred_region
        %s125 = ssub.s32 %s17, 1
      $region12: #{tpu_custom_call.1} parent=5 // pred_fallthru
        _
      %p126 = scmp.lt.s32.totalorder %s17, 2
      // Predicated region
      $region13: #{tpu_custom_call.1} parent=5 // pred_check
        %p127 = pneg %p126
      $region14: #{tpu_custom_call.1} parent=5 // pred_check_branch
        %129 = sbr.rel (%p127) target = $region16
      $region15: #{tpu_custom_call.1} parent=5 // pred_region
        // Predicated region
        $region17: #{tpu_custom_call.1} parent=15 // pred_check
          %p130 = pneg %p51
        $region18: #{tpu_custom_call.1} parent=15 // pred_check_branch
          %132 = sbr.rel (%p130) target = $region20
        $region19: #{tpu_custom_call.1} parent=15 // pred_region
          #allocation9 [shape = 'u32[6]{0}', space=smem, size = 0x18, scoped, tag = 'DMA stride descriptor']
          %s133 = sand.u32 %s41, 1
          %s134 = scalar_lea.sflag [#allocation3], %s133
          %s135 = sand.u32 %s41, 1
          %s136 = smul.addr %s135, 480
          %s137 = scalar_lea.vmem [#allocation2], %s136
          %s138 = sadd.s32 %s24, %s25
          %s139 = smul.u32 2, %s138
          %s141 = ssub.s32 7680, 7680
          %142 = vsyncadd %s134, %s141
          %s143 = smul.addr %s139, 128
          %s144 = scalar_lea.hbm %s0, %s143
          %s146 = sshll.u32 1, 14
          %s147 = sxor.u32 4294967295, %s146
          %s149 = sld [smem:[#allocation0]]
          %s150 = sadd.s32 2, %s149
          %s152 = sshll.u32 7, 26
          %s153 = sxor.u32 4294967295, %s152
          %s154 = sand.u32 0, %s153
          %s155 = sshll.u32 %s150, 26
          %s156 = sor.u32 %s154, %s155
          %s157 = sshll.u32 %s137, 4
          %s158 = int_to_ptr.vmem [resolvable:$true] %s157
          %164 = sst [smem:[#allocation9]] 512
          %s165 = scalar_lea.smem [#allocation9], 1
          %166 = sst [smem:[%s165]] 256
          %s167 = scalar_lea.smem [#allocation9], 2
          %168 = sst [smem:[%s167]] 2
          %s169 = scalar_lea.smem [#allocation9], 3
          %170 = sst [smem:[%s169]] 128
          %s171 = scalar_lea.smem [#allocation9], 4
          %172 = sst [smem:[%s171]] 128
          %s173 = scalar_lea.smem [#allocation9], 5
          %174 = sst [smem:[%s173]] 8
          %176 = dma.general %s144, 7680, %s158, %s134, [#allocation8], [#allocation9], %s156, 0
        $region20: #{tpu_custom_call.1} parent=15 // pred_fallthru
          _
        // Predicated region
        $region21: #{tpu_custom_call.1} parent=15 // pred_check
          %p177 = pneg %p79
        $region22: #{tpu_custom_call.1} parent=15 // pred_check_branch
          %179 = sbr.rel (%p177) target = $region24
        $region23: #{tpu_custom_call.1} parent=15 // pred_region
          #allocation11 [shape = 'u32[6]{0}', space=smem, size = 0x18, scoped, tag = 'DMA stride descriptor']
          %s180 = sand.u32 %s69, 1
          %s181 = scalar_lea.sflag [#allocation6], %s180
          %s182 = sand.u32 %s69, 1
          %s183 = smul.addr %s182, 400
          %s184 = scalar_lea.vmem [#allocation5], %s183
          %s185 = sadd.s32 %s24, %s25
          %s186 = smul.u32 2, %s185
          %s188 = ssub.s32 6400, 6400
          %189 = vsyncadd %s181, %s188
          %s190 = smul.addr %s186, 128
          %s191 = scalar_lea.hbm %s1, %s190
          %s193 = sshll.u32 1, 14
          %s194 = sxor.u32 4294967295, %s193
          %s196 = sld [smem:[#allocation0]]
          %s197 = sadd.s32 2, %s196
          %s199 = sshll.u32 7, 26
          %s200 = sxor.u32 4294967295, %s199
          %s201 = sand.u32 0, %s200
          %s202 = sshll.u32 %s197, 26
          %s203 = sor.u32 %s201, %s202
          %s204 = sshll.u32 %s184, 4
          %s205 = int_to_ptr.vmem [resolvable:$true] %s204
          %211 = sst [smem:[#allocation11]] 512
          %s212 = scalar_lea.smem [#allocation11], 1
          %213 = sst [smem:[%s212]] 256
          %s214 = scalar_lea.smem [#allocation11], 2
          %215 = sst [smem:[%s214]] 2
          %s216 = scalar_lea.smem [#allocation11], 3
          %217 = sst [smem:[%s216]] 128
          %s218 = scalar_lea.smem [#allocation11], 4
          %219 = sst [smem:[%s218]] 128
          %s220 = scalar_lea.smem [#allocation11], 5
          %221 = sst [smem:[%s220]] 8
          %223 = dma.general %s191, 6400, %s205, %s181, [#allocation10], [#allocation11], %s203, 0
        $region24: #{tpu_custom_call.1} parent=15 // pred_fallthru
          _
      $region16: #{tpu_custom_call.1} parent=5 // pred_fallthru
        _
      %p224 = scmp.le.s32.totalorder 1, %s17
      %p225 = scmp.lt.s32.totalorder %s17, 3
      %p226 = pnand %p224, %p225
      %p227 = pneg %p226
      // Predicated region
      $region25: #{tpu_custom_call.1} parent=5 // pred_check
        _
      $region26: #{tpu_custom_call.1} parent=5 // pred_check_branch
        %229 = sbr.rel (%p226) target = $region28
      $region27: #{tpu_custom_call.1} parent=5 // pred_region
        %s230 = ssub.s32 %s17, 1
        %s231 = sand.u32 %s44, 1
        %s232 = scalar_lea.sflag [#allocation3], %s231
        %s233 = sand.u32 %s44, 1
        %s234 = smul.addr %s233, 480
        %s235 = scalar_lea.vmem [#allocation2], %s234
        // Predicated region
        $region29: #{tpu_custom_call.1} parent=27 // pred_check
          %p236 = pneg %p57
        $region30: #{tpu_custom_call.1} parent=27 // pred_check_branch
          %238 = sbr.rel (%p236) target = $region32
        $region31: #{tpu_custom_call.1} parent=27 // pred_region
          %239 = dma.done %s232, 7680
        $region32: #{tpu_custom_call.1} parent=27 // pred_fallthru
          _
        %s240 = sand.u32 %s72, 1
        %s241 = scalar_lea.sflag [#allocation6], %s240
        %s242 = sand.u32 %s72, 1
        %s243 = smul.addr %s242, 400
        %s244 = scalar_lea.vmem [#allocation5], %s243
        // Predicated region
        $region33: #{tpu_custom_call.1} parent=27 // pred_check
          %p245 = pneg %p85
        $region34: #{tpu_custom_call.1} parent=27 // pred_check_branch
          %247 = sbr.rel (%p245) target = $region36
        $region35: #{tpu_custom_call.1} parent=27 // pred_region
          %248 = dma.done %s241, 6400
        $region36: #{tpu_custom_call.1} parent=27 // pred_fallthru
          _
        %s249 = sand.u32 %s44, 1
        %s250 = scalar_lea.sflag [#allocation3], %s249
        %s251 = sand.u32 %s44, 1
        %s252 = smul.addr %s251, 480
        %s253 = scalar_lea.vmem [#allocation2], %s252
        %p254 = pneg %p57
        %p255 = pneg %p54
        %s256 = sand.u32 %s72, 1
        %s257 = scalar_lea.sflag [#allocation6], %s256
        %s258 = sand.u32 %s72, 1
        %s259 = smul.addr %s258, 400
        %s260 = scalar_lea.vmem [#allocation5], %s259
        %p261 = pneg %p85
        %p262 = pneg %p82
        %p263 = pneg %p111
        %p264 = pneg %p108
        %s265 = sand.u32 %s98, 1
        %s266 = scalar_lea.sflag [#allocation4], %s265
        %s267 = sand.u32 %s98, 1
        %s268 = smul.addr %s267, 8
        %s269 = scalar_lea.vmem [#allocation7], %s268
        %s270 = sadd.s32 %s26, %s27
        %s271 = smul.u32 2, %s270
        %s272 = sadd.s32 %s26, %s27
        %s273 = smul.u32 2, %s272
        %p274 = scmp.eq.s32.totalorder %s27, 0
        // Predicated region
        $region37: #{tpu_custom_call.1} parent=27 // pred_check
          %p275 = pneg %p274
        $region38: #{tpu_custom_call.1} parent=27 // pred_check_branch
          %277 = sbr.rel (%p275) target = $region40
        $region39: #{tpu_custom_call.1} parent=27 // pred_region
          %278 = vst [vmem:[%s269] sm:$0xff] 0.0
        $region40: #{tpu_custom_call.1} parent=27 // pred_fallthru
          _
        %v279 = vld [vmem:[%s235] sm:$0xff]
        %v280 = vld [vmem:[%s235 + $0x8] sm:$0xff]
        %v281 = vld [vmem:[%s235 + $0x10] sm:$0xff]
        %v282 = vld [vmem:[%s235 + $0x18] sm:$0xff]
        %v283 = vld [vmem:[%s235 + $0x20] sm:$0xff]
        %v284 = vld [vmem:[%s235 + $0x28] sm:$0xff]
        %v285 = vld [vmem:[%s235 + $0x30] sm:$0xff]
        %v286 = vld [vmem:[%s235 + $0x38] sm:$0xff]
        %v287 = vld [vmem:[%s235 + $0x40] sm:$0xff]
        %v288 = vld [vmem:[%s235 + $0x48] sm:$0xff]
        %v289 = vld [vmem:[%s235 + $0x50] sm:$0xff]
        %v290 = vld [vmem:[%s235 + $0x58] sm:$0xff]
        %v291 = vld [vmem:[%s235 + $0x60] sm:$0xff]
        %v292 = vld [vmem:[%s235 + $0x68] sm:$0xff]
        %v293 = vld [vmem:[%s235 + $0x70] sm:$0xff]
        %v294 = vld [vmem:[%s235 + $0x78] sm:$0xff]
        %v295 = vld [vmem:[%s235 + $0x80] sm:$0xff]
        %v296 = vld [vmem:[%s235 + $0x88] sm:$0xff]
        %v297 = vld [vmem:[%s235 + $0x90] sm:$0xff]
        %v298 = vld [vmem:[%s235 + $0x98] sm:$0xff]
        %v299 = vld [vmem:[%s235 + $0xa0] sm:$0xff]
        %v300 = vld [vmem:[%s235 + $0xa8] sm:$0xff]
        %v301 = vld [vmem:[%s235 + $0xb0] sm:$0xff]
        %v302 = vld [vmem:[%s235 + $0xb8] sm:$0xff]
        %v303 = vld [vmem:[%s235 + $0xc0] sm:$0xff]
        %v304 = vld [vmem:[%s235 + $0xc8] sm:$0xff]
        %v305 = vld [vmem:[%s235 + $0xd0] sm:$0xff]
        %v306 = vld [vmem:[%s235 + $0xd8] sm:$0xff]
        %v307 = vld [vmem:[%s235 + $0xe0] sm:$0xff]
        %v308 = vld [vmem:[%s235 + $0xe8] sm:$0xff]
        %v309 = vld [vmem:[%s235 + $0xf0] sm:$0xff]
        %v310 = vld [vmem:[%s235 + $0xf8] sm:$0xff]
        %v311 = vld [vmem:[%s235 + $0x100] sm:$0xff]
        %v312 = vld [vmem:[%s235 + $0x108] sm:$0xff]
        %v313 = vld [vmem:[%s235 + $0x110] sm:$0xff]
        %v314 = vld [vmem:[%s235 + $0x118] sm:$0xff]
        %v315 = vld [vmem:[%s235 + $0x120] sm:$0xff]
        %v316 = vld [vmem:[%s235 + $0x128] sm:$0xff]
        %v317 = vld [vmem:[%s235 + $0x130] sm:$0xff]
        %v318 = vld [vmem:[%s235 + $0x138] sm:$0xff]
        %v319 = vld [vmem:[%s235 + $0x140] sm:$0xff]
        %v320 = vld [vmem:[%s235 + $0x148] sm:$0xff]
        %v321 = vld [vmem:[%s235 + $0x150] sm:$0xff]
        %v322 = vld [vmem:[%s235 + $0x158] sm:$0xff]
        %v323 = vld [vmem:[%s235 + $0x160] sm:$0xff]
        %v324 = vld [vmem:[%s235 + $0x168] sm:$0xff]
        %v325 = vld [vmem:[%s235 + $0x170] sm:$0xff]
        %v326 = vld [vmem:[%s235 + $0x178] sm:$0xff]
        %v327 = vld [vmem:[%s235 + $0x180] sm:$0xff]
        %v328 = vld [vmem:[%s235 + $0x188] sm:$0xff]
        %v329 = vld [vmem:[%s235 + $0x190] sm:$0xff]
        %v330 = vld [vmem:[%s235 + $0x198] sm:$0xff]
        %v331 = vld [vmem:[%s235 + $0x1a0] sm:$0xff]
        %v332 = vld [vmem:[%s235 + $0x1a8] sm:$0xff]
        %v333 = vld [vmem:[%s235 + $0x1b0] sm:$0xff]
        %v334 = vld [vmem:[%s235 + $0x1b8] sm:$0xff]
        %v335 = vld [vmem:[%s235 + $0x1c0] sm:$0xff]
        %v336 = vld [vmem:[%s235 + $0x1c8] sm:$0xff]
        %v337 = vld [vmem:[%s235 + $0x1d0] sm:$0xff]
        %v338 = vld [vmem:[%s235 + $0x1d8] sm:$0xff]
        %v339 = vld [vmem:[%s244] sm:$0xff]
        %v340 = vld [vmem:[%s244 + $0x8] sm:$0xff]
        %v341 = vld [vmem:[%s244 + $0x10] sm:$0xff]
        %v342 = vld [vmem:[%s244 + $0x18] sm:$0xff]
        %v343 = vld [vmem:[%s244 + $0x20] sm:$0xff]
        %v344 = vld [vmem:[%s244 + $0x28] sm:$0xff]
        %v345 = vld [vmem:[%s244 + $0x30] sm:$0xff]
        %v346 = vld [vmem:[%s244 + $0x38] sm:$0xff]
        %v347 = vld [vmem:[%s244 + $0x40] sm:$0xff]
        %v348 = vld [vmem:[%s244 + $0x48] sm:$0xff]
        %v349 = vld [vmem:[%s244 + $0x50] sm:$0xff]
        %v350 = vld [vmem:[%s244 + $0x58] sm:$0xff]
        %v351 = vld [vmem:[%s244 + $0x60] sm:$0xff]
        %v352 = vld [vmem:[%s244 + $0x68] sm:$0xff]
        %v353 = vld [vmem:[%s244 + $0x70] sm:$0xff]
        %v354 = vld [vmem:[%s244 + $0x78] sm:$0xff]
        %v355 = vld [vmem:[%s244 + $0x80] sm:$0xff]
        %v356 = vld [vmem:[%s244 + $0x88] sm:$0xff]
        %v357 = vld [vmem:[%s244 + $0x90] sm:$0xff]
        %v358 = vld [vmem:[%s244 + $0x98] sm:$0xff]
        %v359 = vld [vmem:[%s244 + $0xa0] sm:$0xff]
        %v360 = vld [vmem:[%s244 + $0xa8] sm:$0xff]
        %v361 = vld [vmem:[%s244 + $0xb0] sm:$0xff]
        %v362 = vld [vmem:[%s244 + $0xb8] sm:$0xff]
        %v363 = vld [vmem:[%s244 + $0xc0] sm:$0xff]
        %v364 = vld [vmem:[%s244 + $0xc8] sm:$0xff]
        %v365 = vld [vmem:[%s244 + $0xd0] sm:$0xff]
        %v366 = vld [vmem:[%s244 + $0xd8] sm:$0xff]
        %v367 = vld [vmem:[%s244 + $0xe0] sm:$0xff]
        %v368 = vld [vmem:[%s244 + $0xe8] sm:$0xff]
        %v369 = vld [vmem:[%s244 + $0xf0] sm:$0xff]
        %v370 = vld [vmem:[%s244 + $0xf8] sm:$0xff]
        %v371 = vld [vmem:[%s244 + $0x100] sm:$0xff]
        %v372 = vld [vmem:[%s244 + $0x108] sm:$0xff]
        %v373 = vld [vmem:[%s244 + $0x110] sm:$0xff]
        %v374 = vld [vmem:[%s244 + $0x118] sm:$0xff]
        %v375 = vld [vmem:[%s244 + $0x120] sm:$0xff]
        %v376 = vld [vmem:[%s244 + $0x128] sm:$0xff]
        %v377 = vld [vmem:[%s244 + $0x130] sm:$0xff]
        %v378 = vld [vmem:[%s244 + $0x138] sm:$0xff]
        %v379 = vld [vmem:[%s244 + $0x140] sm:$0xff]
        %v380 = vld [vmem:[%s244 + $0x148] sm:$0xff]
        %v381 = vld [vmem:[%s244 + $0x150] sm:$0xff]
        %v382 = vld [vmem:[%s244 + $0x158] sm:$0xff]
        %v383 = vld [vmem:[%s244 + $0x160] sm:$0xff]
        %v384 = vld [vmem:[%s244 + $0x168] sm:$0xff]
        %v385 = vld [vmem:[%s244 + $0x170] sm:$0xff]
        %v386 = vld [vmem:[%s244 + $0x178] sm:$0xff]
        %v387 = vld [vmem:[%s244 + $0x180] sm:$0xff]
        %v388 = vld [vmem:[%s244 + $0x188] sm:$0xff]
        %v389 = vsub.f32 1.0, %v379
        %v390 = vsub.f32 1.0, %v380
        %v391 = vmul.f32 %v385, 0.5
        %v392 = vmul.f32 %v386, 0.5
        %v393 = vsub.f32 %v381, %v391
        %v394 = vsub.f32 %v382, %v392
        %v395 = vmul.f32 %v387, 0.5
        %v396 = vmul.f32 %v388, 0.5
        %v397 = vsub.f32 %v383, %v395
        %v398 = vsub.f32 %v384, %v396
        %v399 = vadd.f32 %v381, %v391
        %v400 = vadd.f32 %v382, %v392
        %v401 = vadd.f32 %v383, %v395
        %v402 = vadd.f32 %v384, %v396
        %v403 = vsub.f32 %v399, %v393
        %v404 = vsub.f32 %v400, %v394
        %v405 = vsub.f32 %v401, %v397
        %v406 = vsub.f32 %v402, %v398
        %v407 = vmul.f32 %v403, %v405
        %v408 = vmul.f32 %v404, %v406
        %v409 = vand.u32 2147483647, %v407
        %v410 = vand.u32 2147483647, %v408
        %v411 = vmul.f32 %v325, 0.5
        %v412 = vmul.f32 %v326, 0.5
        %v413 = vsub.f32 %v321, %v411
        %v414 = vsub.f32 %v322, %v412
        %v415 = vmul.f32 %v327, 0.5
        %v416 = vmul.f32 %v328, 0.5
        %v417 = vsub.f32 %v323, %v415
        %v418 = vsub.f32 %v324, %v416
        %v419 = vadd.f32 %v321, %v411
        %v420 = vadd.f32 %v322, %v412
        %v421 = vadd.f32 %v323, %v415
        %v422 = vadd.f32 %v324, %v416
        %v423 = vmin.f32 %v419, %v399
        %v424 = vmin.f32 %v420, %v400
        %v425 = vmax.f32 %v413, %v393
        %v426 = vmax.f32 %v414, %v394
        %v427 = vsub.f32 %v423, %v425
        %v428 = vsub.f32 %v424, %v426
        %v429 = vmax.f32 %v427, 0.0
        %v430 = vmax.f32 %v428, 0.0
        %v431 = vmin.f32 %v421, %v401
        %v432 = vmin.f32 %v422, %v402
        %v433 = vmax.f32 %v417, %v397
        %v434 = vmax.f32 %v418, %v398
        %v435 = vsub.f32 %v431, %v433
        %v436 = vsub.f32 %v432, %v434
        %v437 = vmax.f32 %v435, 0.0
        %v438 = vmax.f32 %v436, 0.0
        %v439 = vmul.f32 %v429, %v437
        %v440 = vmul.f32 %v430, %v438
        %v441 = vsub.f32 %v419, %v413
        %v442 = vsub.f32 %v420, %v414
        %v443 = vsub.f32 %v421, %v417
        %v444 = vsub.f32 %v422, %v418
        %v445 = vmul.f32 %v441, %v443
        %v446 = vmul.f32 %v442, %v444
        %v447 = vand.u32 2147483647, %v445
        %v448 = vand.u32 2147483647, %v446
        %v449 = vadd.f32 %v447, %v409
        %v450 = vadd.f32 %v448, %v410
        %v451 = vsub.f32 %v449, %v439
        %v452 = vsub.f32 %v450, %v440
        %v453 = vadd.f32 %v451, 1e-06
        %v454 = vadd.f32 %v452, 1e-06
        %v455 = vrcp.pop %v453
        %v456 = vmul.f32 %v439, %v455
        %v457 = vrcp.pop %v454
        %v458 = vmul.f32 %v440, %v457
        %v459 = vmul.f32 %v335, 0.5
        %v460 = vmul.f32 %v336, 0.5
        %v461 = vsub.f32 %v331, %v459
        %v462 = vsub.f32 %v332, %v460
        %v463 = vmul.f32 %v337, 0.5
        %v464 = vmul.f32 %v338, 0.5
        %v465 = vsub.f32 %v333, %v463
        %v466 = vsub.f32 %v334, %v464
        %v467 = vadd.f32 %v331, %v459
        %v468 = vadd.f32 %v332, %v460
        %v469 = vadd.f32 %v333, %v463
        %v470 = vadd.f32 %v334, %v464
        %v471 = vmin.f32 %v467, %v399
        %v472 = vmin.f32 %v468, %v400
        %v473 = vmax.f32 %v461, %v393
        %v474 = vmax.f32 %v462, %v394
        %v475 = vsub.f32 %v471, %v473
        %v476 = vsub.f32 %v472, %v474
        %v477 = vmax.f32 %v475, 0.0
        %v478 = vmax.f32 %v476, 0.0
        %v479 = vmin.f32 %v469, %v401
        %v480 = vmin.f32 %v470, %v402
        %v481 = vmax.f32 %v465, %v397
        %v482 = vmax.f32 %v466, %v398
        %v483 = vsub.f32 %v479, %v481
        %v484 = vsub.f32 %v480, %v482
        %v485 = vmax.f32 %v483, 0.0
        %v486 = vmax.f32 %v484, 0.0
        %v487 = vmul.f32 %v477, %v485
        %v488 = vmul.f32 %v478, %v486
        %v489 = vsub.f32 %v467, %v461
        %v490 = vsub.f32 %v468, %v462
        %v491 = vsub.f32 %v469, %v465
        %v492 = vsub.f32 %v470, %v466
        %v493 = vmul.f32 %v489, %v491
        %v494 = vmul.f32 %v490, %v492
        %v495 = vand.u32 2147483647, %v493
        %v496 = vand.u32 2147483647, %v494
        %v497 = vadd.f32 %v495, %v409
        %v498 = vadd.f32 %v496, %v410
        %v499 = vsub.f32 %v497, %v487
        %v500 = vsub.f32 %v498, %v488
        %v501 = vadd.f32 %v499, 1e-06
        %v502 = vadd.f32 %v500, 1e-06
        %v503 = vrcp.pop %v501
        %v504 = vmul.f32 %v487, %v503
        %v505 = vrcp.pop %v502
        %v506 = vmul.f32 %v488, %v505
        %vm507 = vcmp.gt.f32.partialorder %v504, %v456
        %vm508 = vcmp.gt.f32.partialorder %v506, %v458
        %v509 = vmax.f32 %v456, %v504
        %v510 = vmax.f32 %v458, %v506
        %v511 = vsel %vm507, %v331, %v321
        %v512 = vsel %vm508, %v332, %v322
        %v513 = vsel %vm507, %v333, %v323
        %v514 = vsel %vm508, %v334, %v324
        %v515 = vsel %vm507, %v335, %v325
        %v516 = vsel %vm508, %v336, %v326
        %v517 = vsel %vm507, %v337, %v327
        %v518 = vsel %vm508, %v338, %v328
        %v519 = vsub.f32 %v511, %v381
        %v520 = vsub.f32 %v512, %v382
        %v521 = vmul.f32 %v379, %v519
        %v522 = vmul.f32 %v380, %v520
        %v523 = vmul.f32 %v521, %v521
        %v524 = vmul.f32 %v522, %v522
        %v525 = vsub.f32 %v513, %v383
        %v526 = vsub.f32 %v514, %v384
        %v527 = vmul.f32 %v379, %v525
        %v528 = vmul.f32 %v380, %v526
        %v529 = vmul.f32 %v527, %v527
        %v530 = vmul.f32 %v528, %v528
        %v531 = vadd.f32 %v523, %v529
        %v532 = vadd.f32 %v524, %v530
        %v533 = vmul.f32 %v379, %v515
        %v534 = vmul.f32 %v380, %v516
        %v535 = vmul.f32 %v379, %v385
        %v536 = vmul.f32 %v380, %v386
        %v537 = vrsqrt.pop %v535
        %v538 = vmul.f32 %v535, %v537
        %vm539 = vcmp.eq.f32.partialorder %v535, inf
        %v540 = vsel %vm539, %v535, %v538
        %vm541 = vcmp.eq.f32.partialorder %v535, 0.0
        %v542 = vand.u32 %v535, 2147483648
        %v543 = vsel %vm541, %v542, %v540
        %v544 = vrsqrt.pop %v536
        %v545 = vmul.f32 %v536, %v544
        %vm546 = vcmp.eq.f32.partialorder %v536, inf
        %v547 = vsel %vm546, %v536, %v545
        %vm548 = vcmp.eq.f32.partialorder %v536, 0.0
        %v549 = vand.u32 %v536, 2147483648
        %v550 = vsel %vm548, %v549, %v547
        %v551 = vsub.f32 %v533, %v543
        %v552 = vsub.f32 %v534, %v550
        %v553 = vmul.f32 %v551, %v551
        %v554 = vmul.f32 %v552, %v552
        %v555 = vadd.f32 %v531, %v553
        %v556 = vadd.f32 %v532, %v554
        %v557 = vmul.f32 %v379, %v517
        %v558 = vmul.f32 %v380, %v518
        %v559 = vmul.f32 %v379, %v387
        %v560 = vmul.f32 %v380, %v388
        %v561 = vrsqrt.pop %v559
        %v562 = vmul.f32 %v559, %v561
        %vm563 = vcmp.eq.f32.partialorder %v559, inf
        %v564 = vsel %vm563, %v559, %v562
        %vm565 = vcmp.eq.f32.partialorder %v559, 0.0
        %v566 = vand.u32 %v559, 2147483648
        %v567 = vsel %vm565, %v566, %v564
        %v568 = vrsqrt.pop %v560
        %v569 = vmul.f32 %v560, %v568
        %vm570 = vcmp.eq.f32.partialorder %v560, inf
        %v571 = vsel %vm570, %v560, %v569
        %vm572 = vcmp.eq.f32.partialorder %v560, 0.0
        %v573 = vand.u32 %v560, 2147483648
        %v574 = vsel %vm572, %v573, %v571
        %v575 = vsub.f32 %v557, %v567
        %v576 = vsub.f32 %v558, %v574
        %v577 = vmul.f32 %v575, %v575
        %v578 = vmul.f32 %v576, %v576
        %v579 = vadd.f32 %v555, %v577
        %v580 = vadd.f32 %v556, %v578
        %v581 = vsel %vm507, %v329, %v319
        %v582 = vsel %vm508, %v330, %v320
        %v583 = vmul.f32 %v379, %v509
        %v584 = vmul.f32 %v380, %v510
        %v585 = vsub.f32 %v581, %v583
        %v586 = vsub.f32 %v582, %v584
        %v587 = vmul.f32 %v379, %v585
        %v588 = vmul.f32 %v380, %v586
        %v589 = vmul.f32 %v587, %v587
        %v590 = vmul.f32 %v588, %v588
        %v591 = vsub.f32 %v319, %v379
        %v592 = vsub.f32 %v320, %v380
        %v593 = vmul.f32 %v389, %v591
        %v594 = vmul.f32 %v390, %v592
        %v595 = vmul.f32 %v593, %v593
        %v596 = vmul.f32 %v594, %v594
        %v597 = vsub.f32 %v329, %v379
        %v598 = vsub.f32 %v330, %v380
        %v599 = vmul.f32 %v389, %v597
        %v600 = vmul.f32 %v390, %v598
        %v601 = vmul.f32 %v599, %v599
        %v602 = vmul.f32 %v600, %v600
        %v603 = vadd.f32 %v595, %v601
        %v604 = vadd.f32 %v596, %v602
        %v605 = vsub.f32 %v279, %v339
        %v606 = vsub.f32 %v280, %v340
        %v607 = vsub.f32 %v281, %v341
        %v608 = vsub.f32 %v282, %v342
        %v609 = vsub.f32 %v283, %v343
        %v610 = vsub.f32 %v284, %v344
        %v611 = vsub.f32 %v285, %v345
        %v612 = vsub.f32 %v286, %v346
        %v613 = vsub.f32 %v287, %v347
        %v614 = vsub.f32 %v288, %v348
        %v615 = vsub.f32 %v289, %v349
        %v616 = vsub.f32 %v290, %v350
        %v617 = vsub.f32 %v291, %v351
        %v618 = vsub.f32 %v292, %v352
        %v619 = vsub.f32 %v293, %v353
        %v620 = vsub.f32 %v294, %v354
        %v621 = vsub.f32 %v295, %v355
        %v622 = vsub.f32 %v296, %v356
        %v623 = vsub.f32 %v297, %v357
        %v624 = vsub.f32 %v298, %v358
        %v625 = vsub.f32 %v299, %v359
        %v626 = vsub.f32 %v300, %v360
        %v627 = vsub.f32 %v301, %v361
        %v628 = vsub.f32 %v302, %v362
        %v629 = vsub.f32 %v303, %v363
        %v630 = vsub.f32 %v304, %v364
        %v631 = vsub.f32 %v305, %v365
        %v632 = vsub.f32 %v306, %v366
        %v633 = vsub.f32 %v307, %v367
        %v634 = vsub.f32 %v308, %v368
        %v635 = vsub.f32 %v309, %v369
        %v636 = vsub.f32 %v310, %v370
        %v637 = vsub.f32 %v311, %v371
        %v638 = vsub.f32 %v312, %v372
        %v639 = vsub.f32 %v313, %v373
        %v640 = vsub.f32 %v314, %v374
        %v641 = vsub.f32 %v315, %v375
        %v642 = vsub.f32 %v316, %v376
        %v643 = vsub.f32 %v317, %v377
        %v644 = vsub.f32 %v318, %v378
        %v645 = vmul.f32 %v379, %v605
        %v646 = vmul.f32 %v380, %v606
        %v647 = vmul.f32 %v379, %v607
        %v648 = vmul.f32 %v380, %v608
        %v649 = vmul.f32 %v379, %v609
        %v650 = vmul.f32 %v380, %v610
        %v651 = vmul.f32 %v379, %v611
        %v652 = vmul.f32 %v380, %v612
        %v653 = vmul.f32 %v379, %v613
        %v654 = vmul.f32 %v380, %v614
        %v655 = vmul.f32 %v379, %v615
        %v656 = vmul.f32 %v380, %v616
        %v657 = vmul.f32 %v379, %v617
        %v658 = vmul.f32 %v380, %v618
        %v659 = vmul.f32 %v379, %v619
        %v660 = vmul.f32 %v380, %v620
        %v661 = vmul.f32 %v379, %v621
        %v662 = vmul.f32 %v380, %v622
        %v663 = vmul.f32 %v379, %v623
        %v664 = vmul.f32 %v380, %v624
        %v665 = vmul.f32 %v379, %v625
        %v666 = vmul.f32 %v380, %v626
        %v667 = vmul.f32 %v379, %v627
        %v668 = vmul.f32 %v380, %v628
        %v669 = vmul.f32 %v379, %v629
        %v670 = vmul.f32 %v380, %v630
        %v671 = vmul.f32 %v379, %v631
        %v672 = vmul.f32 %v380, %v632
        %v673 = vmul.f32 %v379, %v633
        %v674 = vmul.f32 %v380, %v634
        %v675 = vmul.f32 %v379, %v635
        %v676 = vmul.f32 %v380, %v636
        %v677 = vmul.f32 %v379, %v637
        %v678 = vmul.f32 %v380, %v638
        %v679 = vmul.f32 %v379, %v639
        %v680 = vmul.f32 %v380, %v640
        %v681 = vmul.f32 %v379, %v641
        %v682 = vmul.f32 %v380, %v642
        %v683 = vmul.f32 %v379, %v643
        %v684 = vmul.f32 %v380, %v644
        %v685 = vmul.f32 %v645, %v645
        %v686 = vmul.f32 %v646, %v646
        %v687 = vmul.f32 %v647, %v647
        %v688 = vmul.f32 %v648, %v648
        %v689 = vmul.f32 %v649, %v649
        %v690 = vmul.f32 %v650, %v650
        %v691 = vmul.f32 %v651, %v651
        %v692 = vmul.f32 %v652, %v652
        %v693 = vmul.f32 %v653, %v653
        %v694 = vmul.f32 %v654, %v654
        %v695 = vmul.f32 %v655, %v655
        %v696 = vmul.f32 %v656, %v656
        %v697 = vmul.f32 %v657, %v657
        %v698 = vmul.f32 %v658, %v658
        %v699 = vmul.f32 %v659, %v659
        %v700 = vmul.f32 %v660, %v660
        %v701 = vmul.f32 %v661, %v661
        %v702 = vmul.f32 %v662, %v662
        %v703 = vmul.f32 %v663, %v663
        %v704 = vmul.f32 %v664, %v664
        %v705 = vmul.f32 %v665, %v665
        %v706 = vmul.f32 %v666, %v666
        %v707 = vmul.f32 %v667, %v667
        %v708 = vmul.f32 %v668, %v668
        %v709 = vmul.f32 %v669, %v669
        %v710 = vmul.f32 %v670, %v670
        %v711 = vmul.f32 %v671, %v671
        %v712 = vmul.f32 %v672, %v672
        %v713 = vmul.f32 %v673, %v673
        %v714 = vmul.f32 %v674, %v674
        %v715 = vmul.f32 %v675, %v675
        %v716 = vmul.f32 %v676, %v676
        %v717 = vmul.f32 %v677, %v677
        %v718 = vmul.f32 %v678, %v678
        %v719 = vmul.f32 %v679, %v679
        %v720 = vmul.f32 %v680, %v680
        %v721 = vmul.f32 %v681, %v681
        %v722 = vmul.f32 %v682, %v682
        %v723 = vmul.f32 %v683, %v683
        %v724 = vmul.f32 %v684, %v684
        %v725 = vadd.f32 %v685, %v687
        %v726 = vadd.f32 %v725, %v689
        %v727 = vadd.f32 %v726, %v691
        %v728 = vadd.f32 %v727, %v693
        %v729 = vadd.f32 %v728, %v695
        %v730 = vadd.f32 %v729, %v697
        %v731 = vadd.f32 %v730, %v699
        %v732 = vadd.f32 %v731, %v701
        %v733 = vadd.f32 %v732, %v703
        %v734 = vadd.f32 %v733, %v705
        %v735 = vadd.f32 %v734, %v707
        %v736 = vadd.f32 %v735, %v709
        %v737 = vadd.f32 %v736, %v711
        %v738 = vadd.f32 %v737, %v713
        %v739 = vadd.f32 %v738, %v715
        %v740 = vadd.f32 %v739, %v717
        %v741 = vadd.f32 %v740, %v719
        %v742 = vadd.f32 %v741, %v721
        %v743 = vadd.f32 %v742, %v723
        %v744 = vadd.f32 %v686, %v688
        %v745 = vadd.f32 %v744, %v690
        %v746 = vadd.f32 %v745, %v692
        %v747 = vadd.f32 %v746, %v694
        %v748 = vadd.f32 %v747, %v696
        %v749 = vadd.f32 %v748, %v698
        %v750 = vadd.f32 %v749, %v700
        %v751 = vadd.f32 %v750, %v702
        %v752 = vadd.f32 %v751, %v704
        %v753 = vadd.f32 %v752, %v706
        %v754 = vadd.f32 %v753, %v708
        %v755 = vadd.f32 %v754, %v710
        %v756 = vadd.f32 %v755, %v712
        %v757 = vadd.f32 %v756, %v714
        %v758 = vadd.f32 %v757, %v716
        %v759 = vadd.f32 %v758, %v718
        %v760 = vadd.f32 %v759, %v720
        %v761 = vadd.f32 %v760, %v722
        %v762 = vadd.f32 %v761, %v724
        %v763 = vmul.f32 %v579, 5.0
        %v764 = vmul.f32 %v580, 5.0
        %v765 = vadd.f32 %v763, %v589
        %v766 = vadd.f32 %v764, %v590
        %v767 = vmul.f32 %v603, 0.5
        %v768 = vmul.f32 %v604, 0.5
        %v769 = vadd.f32 %v765, %v767
        %v770 = vadd.f32 %v766, %v768
        %v771 = vadd.f32 %v769, %v743
        %v772 = vadd.f32 %v770, %v762
        %v773 = vadd.f32 %v771, %v772
        %v774 = vld [vmem:[%s269] sm:$0xff]
        %v775 = vadd.f32 %v774, %v773
        %776 = vst [vmem:[%s269] sm:$0xff] %v775
        %s777 = sand.u32 %s98, 1
        %s778 = scalar_lea.sflag [#allocation4], %s777
        %s779 = sand.u32 %s98, 1
        %s780 = smul.addr %s779, 8
        %s781 = scalar_lea.vmem [#allocation7], %s780
        // Predicated region
        $region41: #{tpu_custom_call.1} parent=27 // pred_check
          %p782 = pneg %p108
        $region42: #{tpu_custom_call.1} parent=27 // pred_check_branch
          %784 = sbr.rel (%p782) target = $region44
        $region43: #{tpu_custom_call.1} parent=27 // pred_region
          %s786 = ssub.s32 128, 128
          %787 = vsyncadd %s778, %s786
          %s788 = smul.addr %s26, 128
          %s789 = scalar_lea.hbm %s2, %s788
          %s791 = sshll.u32 %s781, 4
          %s792 = int_to_ptr.vmem [resolvable:$true] %s791
          %794 = dma.vmem_to_hbm [thread:$0]  %s792, 128, %s789, %s778
        $region44: #{tpu_custom_call.1} parent=27 // pred_fallthru
          _
      $region28: #{tpu_custom_call.1} parent=5 // pred_fallthru
        _
      %p795 = scmp.le.s32.totalorder 2, %s17
      // Predicated region
      $region45: #{tpu_custom_call.1} parent=5 // pred_check
        %p796 = pneg %p795
      $region46: #{tpu_custom_call.1} parent=5 // pred_check_branch
        %798 = sbr.rel (%p796) target = $region48
      $region47: #{tpu_custom_call.1} parent=5 // pred_region
        %s799 = ssub.s32 %s17, 2
        // Predicated region
        $region49: #{tpu_custom_call.1} parent=47 // pred_check
          %p800 = pneg %p114
        $region50: #{tpu_custom_call.1} parent=47 // pred_check_branch
          %802 = sbr.rel (%p800) target = $region52
        $region51: #{tpu_custom_call.1} parent=47 // pred_region
          %s803 = sand.u32 %s99, 1
          %s804 = scalar_lea.sflag [#allocation4], %s803
          %s805 = sand.u32 %s99, 1
          %s806 = smul.addr %s805, 8
          %s807 = scalar_lea.vmem [#allocation7], %s806
          %808 = dma.done %s804, 128
        $region52: #{tpu_custom_call.1} parent=47 // pred_fallthru
          _
      $region48: #{tpu_custom_call.1} parent=5 // pred_fallthru
        _
    $region6: #{tpu_custom_call.1} parent=1 // loop_footer
      %s21 = sadd.s32 1, %s17
    $region7: #{tpu_custom_call.1} parent=1 // loop_footer_branch
      %16 = sbr.rel target = $region3
    $region8: #{tpu_custom_call.1} parent=1 // loop_exit
      _
    %809 = vsyncpa [#allocation3], 1
    %s810 = scalar_lea.sflag [#allocation3], 1
    %811 = vsyncpa %s810, 1
    %812 = vsyncpa [#allocation6], 1
    %s813 = scalar_lea.sflag [#allocation6], 1
    %814 = vsyncpa %s813, 1
    %815 = vsyncpa [#allocation4], 1
    %s816 = scalar_lea.sflag [#allocation4], 1
    %817 = vsyncpa %s816, 1

</llo_original>
